<compile_context>
chip_gen: v5e
topology: v5e:2x2
jax: 0.10.0
libtpu: 0.0.40
codegen_flags: <defaults>
</compile_context>

<pallas_src>
import math
import functools

import jax
import jax.numpy as jnp
from jax.experimental import pallas as pl
from jax.experimental.pallas import tpu as pltpu


def _round_up(x, m):
    return ((x + m - 1) // m) * m


def classification_head_kernel(x_ref, w1_ref, b1_ref, w2_ref, b2_ref, o_ref):
    # fc1: cast x to the weight dtype so bf16 weights take the MXU fast path;
    # accumulation is always f32 via preferred_element_type.
    x = x_ref[...].astype(w1_ref.dtype)                                # [TB, E]
    h = jnp.dot(x, w1_ref[...], preferred_element_type=jnp.float32)   # [TB, H]
    h = h + b1_ref[...].astype(jnp.float32)
    # exact GELU (matches nn.GELU default): 0.5*x*(1+erf(x/sqrt(2)))
    h = 0.5 * h * (1.0 + jax.lax.erf(h * (1.0 / math.sqrt(2.0))))
    # dropout(p=0.1): identity at inference time
    out = jnp.dot(h.astype(w2_ref.dtype), w2_ref[...],
                  preferred_element_type=jnp.float32)                  # [TB, C]
    out = out + b2_ref[...].astype(jnp.float32)
    o_ref[...] = out.astype(o_ref.dtype)


def prepare_params(w1, b1, w2, b2, dtype=None):
    """One-time param prep (call at init, NOT per forward):
    zero-pad feature dims to multiples of 128 (exact for x @ W + b) and
    optionally cast to a compute dtype (e.g. jnp.bfloat16)."""
    E, H = w1.shape
    C = w2.shape[1]
    E_pad, H_pad, C_pad = (_round_up(d, 128) for d in (E, H, C))
    w1 = jnp.pad(w1, ((0, E_pad - E), (0, H_pad - H)))
    b1 = jnp.pad(b1.reshape(1, -1), ((0, 0), (0, H_pad - H)))
    w2 = jnp.pad(w2, ((0, H_pad - H), (0, C_pad - C)))
    b2 = jnp.pad(b2.reshape(1, -1), ((0, 0), (0, C_pad - C)))
    if dtype is not None:
        w1, b1, w2, b2 = (t.astype(dtype) for t in (w1, b1, w2, b2))
    return w1, b1, w2, b2


@functools.partial(jax.jit, static_argnames=("classes", "block_b"))
def classification_head(x, w1, b1, w2, b2, *, classes, block_b=512):
    """x: [B, E]; w1/b1/w2/b2 already padded via prepare_params. -> [B, classes]."""
    B, E = x.shape
    E_pad, H_pad = w1.shape
    C_pad = w2.shape[1]

    # Only x is padded per call (feature dim to match the pre-padded weights).
    if E_pad != E:
        x = jnp.pad(x, ((0, 0), (0, E_pad - E)))

    # --- batch tiling: sublane multiple 8 (f32) / 16 (bf16) ---
    row = 16 if x.dtype == jnp.bfloat16 else 8
    tb = min(_round_up(block_b, row), _round_up(B, row))
    # Prefer >=2 grid steps when the batch allows it (v7x megacore: 2 TCs/chip).
    if _round_up(B, row) // tb < 2 and B >= 2 * row:
        tb = _round_up(-(-B // 2), row)
    B_pad = _round_up(B, tb)
    if B_pad != B:
        x = jnp.pad(x, ((0, B_pad - B), (0, 0)))
    grid = (B_pad // tb,)

    # --- VMEM budget & cost estimate from the actual buffers ---
    w_itemsize = jnp.dtype(w1.dtype).itemsize
    x_itemsize = jnp.dtype(x.dtype).itemsize
    w_bytes = (w1.size + b1.size + w2.size + b2.size) * w_itemsize     # single-buffered
    io_bytes = 2 * tb * (E_pad + C_pad) * x_itemsize                   # double-buffered x/out
    vmem_needed = w_bytes + io_bytes + (4 << 20)                       # + headroom
    vmem_limit = int(min(max(vmem_needed, 32 << 20), 64 << 20))

    cost = pl.CostEstimate(
        flops=2 * B_pad * (E_pad * H_pad + H_pad * C_pad),
        transcendentals=0,
        bytes_accessed=int(w_bytes + B_pad * (E_pad + C_pad) * x_itemsize),
    )

    # Constant index_map -> a second pipeline buffer is never filled.
    weight_mode = pl.Buffered(1)

    out = pl.pallas_call(
        classification_head_kernel,
        out_shape=jax.ShapeDtypeStruct((B_pad, C_pad), x.dtype),
        grid=grid,
        in_specs=[
            pl.BlockSpec((tb, E_pad), lambda i: (i, 0)),                # x: streamed per tile
            pl.BlockSpec((E_pad, H_pad), lambda i: (0, 0),
                         pipeline_mode=weight_mode),                    # W1: resident, 1 buf
            pl.BlockSpec((1, H_pad), lambda i: (0, 0),
                         pipeline_mode=weight_mode),                    # b1
            pl.BlockSpec((H_pad, C_pad), lambda i: (0, 0),
                         pipeline_mode=weight_mode),                    # W2: resident, 1 buf
            pl.BlockSpec((1, C_pad), lambda i: (0, 0),
                         pipeline_mode=weight_mode),                    # b2
        ],
        out_specs=pl.BlockSpec((tb, C_pad), lambda i: (i, 0)),
        compiler_params=pltpu.CompilerParams(
            dimension_semantics=("parallel",),
            vmem_limit_bytes=vmem_limit,
        ),
        cost_estimate=cost,
    )(x, w1, b1, w2, b2)

    return out[:B, :classes]


def init_params(key, embed_dim, classes, dtype=jnp.float32):
    """Deterministic init mimicking nn.Linear default (uniform in +-1/sqrt(fan_in)).
    Weights stored as [in_features, out_features] (transpose of PyTorch layout)."""
    hidden = embed_dim // 2
    k1, k2, k3, k4 = jax.random.split(key, 4)
    bound1 = 1.0 / math.sqrt(embed_dim)
    bound2 = 1.0 / math.sqrt(hidden)
    w1 = jax.random.uniform(k1, (embed_dim, hidden), dtype, -bound1, bound1)
    b1 = jax.random.uniform(k2, (hidden,), dtype, -bound1, bound1)
    w2 = jax.random.uniform(k3, (hidden, classes), dtype, -bound2, bound2)
    b2 = jax.random.uniform(k4, (classes,), dtype, -bound2, bound2)
    return w1, b1, w2, b2


def reference(x, w1, b1, w2, b2):
    h = x @ w1 + b1
    h = 0.5 * h * (1.0 + jax.lax.erf(h / jnp.sqrt(2.0)))
    return h @ w2 + b2


if __name__ == "__main__":
    batch = 8
    embed_dim = 512   # module config: fc1 512 -> 256, fc2 256 -> 10
    classes = 10

    key = jax.random.PRNGKey(0)
    kx, kp = jax.random.split(key)
    x = jax.random.normal(kx, (batch, embed_dim), jnp.float32)
    w1, b1, w2, b2 = init_params(kp, embed_dim, classes, jnp.float32)

    # Reference uses the raw (unpadded) params.
    ref = reference(x, w1, b1, w2, b2)

    # One-time layout prep (padding happens here, NOT in the per-call path).
    pw1, pb1, pw2, pb2 = prepare_params(w1, b1, w2, b2)

    out = classification_head(x, pw1, pb1, pw2, pb2, classes=classes)
    out = jax.block_until_ready(out)

    assert out.shape == (batch, classes)
    assert jnp.allclose(out, ref, atol=1e-4, rtol=1e-4), float(
        jnp.max(jnp.abs(out - ref)))

    print("KERNEL_OK")
</pallas_src>

<mosaic_0001>
module attributes {stable_mosaic.version = 11 : i64} {
  func.func @classification_head_kernel(%arg0: i32, %arg1: memref<8x512xf32, #tpu.memory_space<vmem>>, %arg2: memref<512x256xf32, #tpu.memory_space<vmem>>, %arg3: memref<1x256xf32, #tpu.memory_space<vmem>>, %arg4: memref<256x128xf32, #tpu.memory_space<vmem>>, %arg5: memref<1x128xf32, #tpu.memory_space<vmem>>, %arg6: memref<8x128xf32, #tpu.memory_space<vmem>>) attributes {dimension_semantics = [#tpu.dimension_semantics<parallel>], iteration_bounds = array<i64: 1>, scalar_prefetch = 0 : i64, scratch_operands = 0 : i64, tpu.core_type = #tpu.core_type<tc>, window_params = [{transform_indices = @transform_0, window_bounds = array<i64: 8, 512>}, {pipeline_mode = #tpu.pipeline_mode<synchronous>, transform_indices = @transform_1, window_bounds = array<i64: 512, 256>}, {pipeline_mode = #tpu.pipeline_mode<synchronous>, transform_indices = @transform_2, window_bounds = array<i64: 1, 256>}, {pipeline_mode = #tpu.pipeline_mode<synchronous>, transform_indices = @transform_3, window_bounds = array<i64: 256, 128>}, {pipeline_mode = #tpu.pipeline_mode<synchronous>, transform_indices = @transform_4, window_bounds = array<i64: 1, 128>}, {transform_indices = @transform_5, window_bounds = array<i64: 8, 128>}]} {
    %c0 = arith.constant 0 : index
    %c0_0 = arith.constant 0 : index
    %0 = vector.load %arg1[%c0, %c0_0] : memref<8x512xf32, #tpu.memory_space<vmem>>, vector<8x512xf32>
    %c0_1 = arith.constant 0 : index
    %c0_2 = arith.constant 0 : index
    %1 = vector.load %arg2[%c0_1, %c0_2] : memref<512x256xf32, #tpu.memory_space<vmem>>, vector<512x256xf32>
    %cst = arith.constant dense<0.000000e+00> : vector<8x256xf32>
    %2 = tpu.matmul %0, %1, %cst {dimension_numbers = #tpu.dot_dimension_numbers<[1], [0], [0], [1], [0, 0, 1, 1], [], []>} : vector<8x512xf32>, vector<512x256xf32>, vector<8x256xf32> -> vector<8x256xf32>
    %c0_3 = arith.constant 0 : index
    %c0_4 = arith.constant 0 : index
    %3 = vector.load %arg3[%c0_3, %c0_4] : memref<1x256xf32, #tpu.memory_space<vmem>>, vector<1x256xf32>
    %4 = vector.broadcast %3 : vector<1x256xf32> to vector<8x256xf32>
    %5 = arith.addf %2, %4 : vector<8x256xf32>
    %cst_5 = arith.constant 5.000000e-01 : f32
    %6 = vector.broadcast %cst_5 : f32 to vector<8x256xf32>
    %7 = arith.mulf %6, %5 : vector<8x256xf32>
    %cst_6 = arith.constant 0.707106769 : f32
    %8 = vector.broadcast %cst_6 : f32 to vector<8x256xf32>
    %9 = arith.mulf %5, %8 : vector<8x256xf32>
    %10 = math.erf %9 : vector<8x256xf32>
    %cst_7 = arith.constant 1.000000e+00 : f32
    %11 = vector.broadcast %cst_7 : f32 to vector<8x256xf32>
    %12 = arith.addf %11, %10 : vector<8x256xf32>
    %13 = arith.mulf %7, %12 : vector<8x256xf32>
    %c0_8 = arith.constant 0 : index
    %c0_9 = arith.constant 0 : index
    %14 = vector.load %arg4[%c0_8, %c0_9] : memref<256x128xf32, #tpu.memory_space<vmem>>, vector<256x128xf32>
    %cst_10 = arith.constant dense<0.000000e+00> : vector<8x128xf32>
    %15 = tpu.matmul %13, %14, %cst_10 {dimension_numbers = #tpu.dot_dimension_numbers<[1], [0], [0], [1], [0, 0, 1, 1], [], []>} : vector<8x256xf32>, vector<256x128xf32>, vector<8x128xf32> -> vector<8x128xf32>
    %c0_11 = arith.constant 0 : index
    %c0_12 = arith.constant 0 : index
    %16 = vector.load %arg5[%c0_11, %c0_12] : memref<1x128xf32, #tpu.memory_space<vmem>>, vector<1x128xf32>
    %17 = vector.broadcast %16 : vector<1x128xf32> to vector<8x128xf32>
    %18 = arith.addf %15, %17 : vector<8x128xf32>
    %c0_13 = arith.constant 0 : index
    %c0_14 = arith.constant 0 : index
    %19 = vector.load %arg6[%c0_13, %c0_14] : memref<8x128xf32, #tpu.memory_space<vmem>>, vector<8x128xf32>
    tpu.vector_store %arg6[%c0_13, %c0_14], %18 {strides = array<i32>} : memref<8x128xf32, #tpu.memory_space<vmem>>, vector<8x128xf32>,
    return
  }
  func.func @transform_0(%arg0: i32) -> (i32, i32) {
    %c0_i32 = arith.constant 0 : i32
    %c0_i32_0 = arith.constant 0 : i32
    return %arg0, %c0_i32 : i32, i32
  }
  func.func @transform_1(%arg0: i32) -> (i32, i32) {
    %c0_i32 = arith.constant 0 : i32
    %c0_i32_0 = arith.constant 0 : i32
    %c0_i32_1 = arith.constant 0 : i32
    return %c0_i32, %c0_i32_0 : i32, i32
  }
  func.func @transform_2(%arg0: i32) -> (i32, i32) {
    %c0_i32 = arith.constant 0 : i32
    %c0_i32_0 = arith.constant 0 : i32
    %c0_i32_1 = arith.constant 0 : i32
    return %c0_i32, %c0_i32_0 : i32, i32
  }
  func.func @transform_3(%arg0: i32) -> (i32, i32) {
    %c0_i32 = arith.constant 0 : i32
    %c0_i32_0 = arith.constant 0 : i32
    %c0_i32_1 = arith.constant 0 : i32
    return %c0_i32, %c0_i32_0 : i32, i32
  }
  func.func @transform_4(%arg0: i32) -> (i32, i32) {
    %c0_i32 = arith.constant 0 : i32
    %c0_i32_0 = arith.constant 0 : i32
    %c0_i32_1 = arith.constant 0 : i32
    return %c0_i32, %c0_i32_0 : i32, i32
  }
  func.func @transform_5(%arg0: i32) -> (i32, i32) {
    %c0_i32 = arith.constant 0 : i32
    %c0_i32_0 = arith.constant 0 : i32
    return %arg0, %c0_i32 : i32, i32
  }
}

</mosaic_0001>

<llo_original>
// kernel: classification_head.1
$region0: #{classification_head.1}
  #allocation0 [shape = 'u32[]', space=smem, size = 0x4, offset = 0x4, fixed_abs, tag = 'smem constant byte address 0x4 - core index']
  #allocation1 [shape = 'u32[72,128]{1,0:T(1,128)}', space=vmem, size = 0x9000, scoped, tag = 'internal scratch']
  %s0 = inlined_call_operand.hbm [shape: f32[8,512], index: 0, kind: input, shape index: {}]
  %s1 = inlined_call_operand.hbm [shape: f32[512,256], index: 1, kind: input, shape index: {}]
  %s2 = inlined_call_operand.hbm [shape: f32[1,256], index: 2, kind: input, shape index: {}]
  %s3 = inlined_call_operand.hbm [shape: f32[256,128], index: 3, kind: input, shape index: {}]
  %s4 = inlined_call_operand.vmem [shape: f32[1,128], index: 4, kind: input, shape index: {}]
  %s5 = inlined_call_operand.hbm [shape: f32[8,128], index: 5, kind: output, shape index: {}]
  %s6 = sld [smem:[#allocation0]]
  $region46: #{classification_head.1} parent=0
    _
  %s8 = ssub.s32 1, %s6
  %s9 = scalar_select 0, %s8, %s6
  $region1: #{classification_head.1} parent=0
    #allocation2 [shape = 'u8[16384]{0}', space=vmem, size = 0x4000, scoped, tag = 'input window, operand 0, single buffered']
    #allocation3 [shape = 's32[1]{0}', space=sflag, size = 0x4, scoped, tag = 'scoped memory for classification_head.1']
    #allocation4 [shape = 's32[1]{0}', space=sflag, size = 0x4, scoped, tag = 'scoped memory for classification_head.1']
    #allocation5 [shape = 'u8[524288]{0}', space=vmem, size = 0x80000, scoped, tag = 'input window, operand 1, single buffered']
    #allocation6 [shape = 's32[1]{0}', space=sflag, size = 0x4, scoped, tag = 'scoped memory for classification_head.1']
    #allocation7 [shape = 'u8[1024]{0}', space=vmem, size = 0x400, scoped, tag = 'input window, operand 2, single buffered']
    #allocation8 [shape = 'u8[131072]{0}', space=vmem, size = 0x20000, scoped, tag = 'input window, operand 3, single buffered']
    #allocation9 [shape = 's32[1]{0}', space=sflag, size = 0x4, scoped, tag = 'scoped memory for classification_head.1']
    #allocation10 [shape = 'u8[4096]{0}', space=vmem, size = 0x1000, scoped, tag = 'output window, operand 0, single buffered']
    %10 = vsyncpa [#allocation3], 0
    %11 = vsyncpa [#allocation6], 0
    %12 = vsyncpa [#allocation9], 0
    %13 = vsyncpa [#allocation4], 0
    // Predicated region
    $region2: #{classification_head.1} parent=1 // pred_check
      _
    $region3: #{classification_head.1} parent=1 // pred_check_branch
      %15 = sbr.rel (0) target = $region5
    $region4: #{classification_head.1} parent=1 // pred_region
      %17 = vsyncadd [#allocation3], 0
      %s19 = sshll.u32 %s0, 4
      %s20 = int_to_ptr.hbm [resolvable:$true] %s19
      %s21 = sshll.u32 [#allocation2], 4
      %s22 = int_to_ptr.vmem [resolvable:$true] %s21
      %24 = dma.hbm_to_vmem [thread:$0]  %s20, 512, %s22, [#allocation3]
    $region5: #{classification_head.1} parent=1 // pred_fallthru
      _
    // Predicated region
    $region6: #{classification_head.1} parent=1 // pred_check
      _
    $region7: #{classification_head.1} parent=1 // pred_check_branch
      %26 = sbr.rel (0) target = $region9
    $region8: #{classification_head.1} parent=1 // pred_region
      %28 = vsyncadd [#allocation6], 0
      %s29 = sshll.u32 %s1, 4
      %s30 = int_to_ptr.hbm [resolvable:$true] %s29
      %s31 = sshll.u32 [#allocation5], 4
      %s32 = int_to_ptr.vmem [resolvable:$true] %s31
      %37 = dma.hbm_to_vmem [thread:$0]  %s30, 16384, %s32, [#allocation6], 256, 256, 16
    $region9: #{classification_head.1} parent=1 // pred_fallthru
      _
    // Predicated region
    $region10: #{classification_head.1} parent=1 // pred_check
      _
    $region11: #{classification_head.1} parent=1 // pred_check_branch
      %39 = sbr.rel (0) target = $region13
    $region12: #{classification_head.1} parent=1 // pred_region
      %41 = vsyncadd [#allocation6], 0
      %s43 = sshll.u32 %s2, 4
      %s44 = int_to_ptr.hbm [resolvable:$true] %s43
      %s45 = sshll.u32 [#allocation7], 4
      %s46 = int_to_ptr.vmem [resolvable:$true] %s45
      %48 = dma.hbm_to_vmem [thread:$0]  %s44, 32, %s46, [#allocation6]
    $region13: #{classification_head.1} parent=1 // pred_fallthru
      _
    // Predicated region
    $region14: #{classification_head.1} parent=1 // pred_check
      _
    $region15: #{classification_head.1} parent=1 // pred_check_branch
      %50 = sbr.rel (0) target = $region17
    $region16: #{classification_head.1} parent=1 // pred_region
      %52 = vsyncadd [#allocation9], 0
      %s53 = sshll.u32 %s3, 4
      %s54 = int_to_ptr.hbm [resolvable:$true] %s53
      %s55 = sshll.u32 [#allocation8], 4
      %s56 = int_to_ptr.vmem [resolvable:$true] %s55
      %61 = dma.hbm_to_vmem [thread:$0]  %s54, 4096, %s56, [#allocation9], 128, 128, 8
    $region17: #{classification_head.1} parent=1 // pred_fallthru
      _
    // Predicated region
    $region18: #{classification_head.1} parent=1 // pred_check
      _
    $region19: #{classification_head.1} parent=1 // pred_check_branch
      %63 = sbr.rel (0) target = $region21
    $region20: #{classification_head.1} parent=1 // pred_region
      _
    $region21: #{classification_head.1} parent=1 // pred_fallthru
      _
    // Predicated region
    $region22: #{classification_head.1} parent=1 // pred_check
      _
    $region23: #{classification_head.1} parent=1 // pred_check_branch
      %65 = sbr.rel (0) target = $region25
    $region24: #{classification_head.1} parent=1 // pred_region
      %67 = dma.done [#allocation3], 512
    $region25: #{classification_head.1} parent=1 // pred_fallthru
      _
    // Predicated region
    $region26: #{classification_head.1} parent=1 // pred_check
      _
    $region27: #{classification_head.1} parent=1 // pred_check_branch
      %69 = sbr.rel (0) target = $region29
    $region28: #{classification_head.1} parent=1 // pred_region
      %71 = dma.done [#allocation6], 16384
    $region29: #{classification_head.1} parent=1 // pred_fallthru
      _
    // Predicated region
    $region30: #{classification_head.1} parent=1 // pred_check
      _
    $region31: #{classification_head.1} parent=1 // pred_check_branch
      %73 = sbr.rel (0) target = $region33
    $region32: #{classification_head.1} parent=1 // pred_region
      %75 = dma.done [#allocation6], 32
    $region33: #{classification_head.1} parent=1 // pred_fallthru
      _
    // Predicated region
    $region34: #{classification_head.1} parent=1 // pred_check
      _
    $region35: #{classification_head.1} parent=1 // pred_check_branch
      %77 = sbr.rel (0) target = $region37
    $region36: #{classification_head.1} parent=1 // pred_region
      %79 = dma.done [#allocation9], 4096
    $region37: #{classification_head.1} parent=1 // pred_fallthru
      _
    %v80 = vld [vmem:[#allocation2] sm:$0xff]
    %v81 = vld [vmem:[#allocation2 + $0x8] sm:$0xff]
    %v82 = vld [vmem:[#allocation2 + $0x10] sm:$0xff]
    %v83 = vld [vmem:[#allocation2 + $0x18] sm:$0xff]
    %v84 = vld [vmem:[#allocation5] sm:$0xff]
    %v85 = vld [vmem:[#allocation5 + $0x8] sm:$0xff]
    %v86 = vld [vmem:[#allocation5 + $0x10] sm:$0xff]
    %v87 = vld [vmem:[#allocation5 + $0x18] sm:$0xff]
    %v88 = vld [vmem:[#allocation5 + $0x20] sm:$0xff]
    %v89 = vld [vmem:[#allocation5 + $0x28] sm:$0xff]
    %v90 = vld [vmem:[#allocation5 + $0x30] sm:$0xff]
    %v91 = vld [vmem:[#allocation5 + $0x38] sm:$0xff]
    %v92 = vld [vmem:[#allocation5 + $0x40] sm:$0xff]
    %v93 = vld [vmem:[#allocation5 + $0x48] sm:$0xff]
    %v94 = vld [vmem:[#allocation5 + $0x50] sm:$0xff]
    %v95 = vld [vmem:[#allocation5 + $0x58] sm:$0xff]
    %v96 = vld [vmem:[#allocation5 + $0x60] sm:$0xff]
    %v97 = vld [vmem:[#allocation5 + $0x68] sm:$0xff]
    %v98 = vld [vmem:[#allocation5 + $0x70] sm:$0xff]
    %v99 = vld [vmem:[#allocation5 + $0x78] sm:$0xff]
    %v100 = vld [vmem:[#allocation5 + $0x80] sm:$0xff]
    %v101 = vld [vmem:[#allocation5 + $0x88] sm:$0xff]
    %v102 = vld [vmem:[#allocation5 + $0x90] sm:$0xff]
    %v103 = vld [vmem:[#allocation5 + $0x98] sm:$0xff]
    %v104 = vld [vmem:[#allocation5 + $0xa0] sm:$0xff]
    %v105 = vld [vmem:[#allocation5 + $0xa8] sm:$0xff]
    %v106 = vld [vmem:[#allocation5 + $0xb0] sm:$0xff]
    %v107 = vld [vmem:[#allocation5 + $0xb8] sm:$0xff]
    %v108 = vld [vmem:[#allocation5 + $0xc0] sm:$0xff]
    %v109 = vld [vmem:[#allocation5 + $0xc8] sm:$0xff]
    %v110 = vld [vmem:[#allocation5 + $0xd0] sm:$0xff]
    %v111 = vld [vmem:[#allocation5 + $0xd8] sm:$0xff]
    %v112 = vld [vmem:[#allocation5 + $0xe0] sm:$0xff]
    %v113 = vld [vmem:[#allocation5 + $0xe8] sm:$0xff]
    %v114 = vld [vmem:[#allocation5 + $0xf0] sm:$0xff]
    %v115 = vld [vmem:[#allocation5 + $0xf8] sm:$0xff]
    %v116 = vld [vmem:[#allocation5 + $0x100] sm:$0xff]
    %v117 = vld [vmem:[#allocation5 + $0x108] sm:$0xff]
    %v118 = vld [vmem:[#allocation5 + $0x110] sm:$0xff]
    %v119 = vld [vmem:[#allocation5 + $0x118] sm:$0xff]
    %v120 = vld [vmem:[#allocation5 + $0x120] sm:$0xff]
    %v121 = vld [vmem:[#allocation5 + $0x128] sm:$0xff]
    %v122 = vld [vmem:[#allocation5 + $0x130] sm:$0xff]
    %v123 = vld [vmem:[#allocation5 + $0x138] sm:$0xff]
    %v124 = vld [vmem:[#allocation5 + $0x140] sm:$0xff]
    %v125 = vld [vmem:[#allocation5 + $0x148] sm:$0xff]
    %v126 = vld [vmem:[#allocation5 + $0x150] sm:$0xff]
    %v127 = vld [vmem:[#allocation5 + $0x158] sm:$0xff]
    %v128 = vld [vmem:[#allocation5 + $0x160] sm:$0xff]
    %v129 = vld [vmem:[#allocation5 + $0x168] sm:$0xff]
    %v130 = vld [vmem:[#allocation5 + $0x170] sm:$0xff]
    %v131 = vld [vmem:[#allocation5 + $0x178] sm:$0xff]
    %v132 = vld [vmem:[#allocation5 + $0x180] sm:$0xff]
    %v133 = vld [vmem:[#allocation5 + $0x188] sm:$0xff]
    %v134 = vld [vmem:[#allocation5 + $0x190] sm:$0xff]
    %v135 = vld [vmem:[#allocation5 + $0x198] sm:$0xff]
    %v136 = vld [vmem:[#allocation5 + $0x1a0] sm:$0xff]
    %v137 = vld [vmem:[#allocation5 + $0x1a8] sm:$0xff]
    %v138 = vld [vmem:[#allocation5 + $0x1b0] sm:$0xff]
    %v139 = vld [vmem:[#allocation5 + $0x1b8] sm:$0xff]
    %v140 = vld [vmem:[#allocation5 + $0x1c0] sm:$0xff]
    %v141 = vld [vmem:[#allocation5 + $0x1c8] sm:$0xff]
    %v142 = vld [vmem:[#allocation5 + $0x1d0] sm:$0xff]
    %v143 = vld [vmem:[#allocation5 + $0x1d8] sm:$0xff]
    %v144 = vld [vmem:[#allocation5 + $0x1e0] sm:$0xff]
    %v145 = vld [vmem:[#allocation5 + $0x1e8] sm:$0xff]
    %v146 = vld [vmem:[#allocation5 + $0x1f0] sm:$0xff]
    %v147 = vld [vmem:[#allocation5 + $0x1f8] sm:$0xff]
    %v148 = vld [vmem:[#allocation5 + $0x200] sm:$0xff]
    %v149 = vld [vmem:[#allocation5 + $0x208] sm:$0xff]
    %v150 = vld [vmem:[#allocation5 + $0x210] sm:$0xff]
    %v151 = vld [vmem:[#allocation5 + $0x218] sm:$0xff]
    %v152 = vld [vmem:[#allocation5 + $0x220] sm:$0xff]
    %v153 = vld [vmem:[#allocation5 + $0x228] sm:$0xff]
    %v154 = vld [vmem:[#allocation5 + $0x230] sm:$0xff]
    %v155 = vld [vmem:[#allocation5 + $0x238] sm:$0xff]
    %v156 = vld [vmem:[#allocation5 + $0x240] sm:$0xff]
    %v157 = vld [vmem:[#allocation5 + $0x248] sm:$0xff]
    %v158 = vld [vmem:[#allocation5 + $0x250] sm:$0xff]
    %v159 = vld [vmem:[#allocation5 + $0x258] sm:$0xff]
    %v160 = vld [vmem:[#allocation5 + $0x260] sm:$0xff]
    %v161 = vld [vmem:[#allocation5 + $0x268] sm:$0xff]
    %v162 = vld [vmem:[#allocation5 + $0x270] sm:$0xff]
    %v163 = vld [vmem:[#allocation5 + $0x278] sm:$0xff]
    %v164 = vld [vmem:[#allocation5 + $0x280] sm:$0xff]
    %v165 = vld [vmem:[#allocation5 + $0x288] sm:$0xff]
    %v166 = vld [vmem:[#allocation5 + $0x290] sm:$0xff]
    %v167 = vld [vmem:[#allocation5 + $0x298] sm:$0xff]
    %v168 = vld [vmem:[#allocation5 + $0x2a0] sm:$0xff]
    %v169 = vld [vmem:[#allocation5 + $0x2a8] sm:$0xff]
    %v170 = vld [vmem:[#allocation5 + $0x2b0] sm:$0xff]
    %v171 = vld [vmem:[#allocation5 + $0x2b8] sm:$0xff]
    %v172 = vld [vmem:[#allocation5 + $0x2c0] sm:$0xff]
    %v173 = vld [vmem:[#allocation5 + $0x2c8] sm:$0xff]
    %v174 = vld [vmem:[#allocation5 + $0x2d0] sm:$0xff]
    %v175 = vld [vmem:[#allocation5 + $0x2d8] sm:$0xff]
    %v176 = vld [vmem:[#allocation5 + $0x2e0] sm:$0xff]
    %v177 = vld [vmem:[#allocation5 + $0x2e8] sm:$0xff]
    %v178 = vld [vmem:[#allocation5 + $0x2f0] sm:$0xff]
    %v179 = vld [vmem:[#allocation5 + $0x2f8] sm:$0xff]
    %v180 = vld [vmem:[#allocation5 + $0x300] sm:$0xff]
    %v181 = vld [vmem:[#allocation5 + $0x308] sm:$0xff]
    %v182 = vld [vmem:[#allocation5 + $0x310] sm:$0xff]
    %v183 = vld [vmem:[#allocation5 + $0x318] sm:$0xff]
    %v184 = vld [vmem:[#allocation5 + $0x320] sm:$0xff]
    %v185 = vld [vmem:[#allocation5 + $0x328] sm:$0xff]
    %v186 = vld [vmem:[#allocation5 + $0x330] sm:$0xff]
    %v187 = vld [vmem:[#allocation5 + $0x338] sm:$0xff]
    %v188 = vld [vmem:[#allocation5 + $0x340] sm:$0xff]
    %v189 = vld [vmem:[#allocation5 + $0x348] sm:$0xff]
    %v190 = vld [vmem:[#allocation5 + $0x350] sm:$0xff]
    %v191 = vld [vmem:[#allocation5 + $0x358] sm:$0xff]
    %v192 = vld [vmem:[#allocation5 + $0x360] sm:$0xff]
    %v193 = vld [vmem:[#allocation5 + $0x368] sm:$0xff]
    %v194 = vld [vmem:[#allocation5 + $0x370] sm:$0xff]
    %v195 = vld [vmem:[#allocation5 + $0x378] sm:$0xff]
    %v196 = vld [vmem:[#allocation5 + $0x380] sm:$0xff]
    %v197 = vld [vmem:[#allocation5 + $0x388] sm:$0xff]
    %v198 = vld [vmem:[#allocation5 + $0x390] sm:$0xff]
    %v199 = vld [vmem:[#allocation5 + $0x398] sm:$0xff]
    %v200 = vld [vmem:[#allocation5 + $0x3a0] sm:$0xff]
    %v201 = vld [vmem:[#allocation5 + $0x3a8] sm:$0xff]
    %v202 = vld [vmem:[#allocation5 + $0x3b0] sm:$0xff]
    %v203 = vld [vmem:[#allocation5 + $0x3b8] sm:$0xff]
    %v204 = vld [vmem:[#allocation5 + $0x3c0] sm:$0xff]
    %v205 = vld [vmem:[#allocation5 + $0x3c8] sm:$0xff]
    %v206 = vld [vmem:[#allocation5 + $0x3d0] sm:$0xff]
    %v207 = vld [vmem:[#allocation5 + $0x3d8] sm:$0xff]
    %v208 = vld [vmem:[#allocation5 + $0x3e0] sm:$0xff]
    %v209 = vld [vmem:[#allocation5 + $0x3e8] sm:$0xff]
    %v210 = vld [vmem:[#allocation5 + $0x3f0] sm:$0xff]
    %v211 = vld [vmem:[#allocation5 + $0x3f8] sm:$0xff]
    %v212 = vld [vmem:[#allocation7] sm:$0x3]
    %v214 = vperm.slane %v212, 0
    %v215 = vperm.slane %v212, 1
    %218 = vmatpush.msra.mxu0 %v114
    %219 = vmatpush.msra.mxu0 %v112
    %220 = vmatpush.msra.mxu0 %v110
    %221 = vmatpush.msra.mxu0 %v108
    %222 = vmatpush.msra.mxu0 %v106
    %223 = vmatpush.msra.mxu0 %v104
    %224 = vmatpush.msra.mxu0 %v102
    %225 = vmatpush.msra.mxu0 %v100
    %226 = vmatpush.msra.mxu0 %v98
    %227 = vmatpush.msra.mxu0 %v96
    %228 = vmatpush.msra.mxu0 %v94
    %229 = vmatpush.msra.mxu0 %v92
    %230 = vmatpush.msra.mxu0 %v90
    %231 = vmatpush.msra.mxu0 %v88
    %232 = vmatpush.msra.mxu0 %v86
    %233 = vmatpush.msra.mxu0 %v84
    %234 = vmatmul.f32.gmra.mxu0 %v80
    %v235 = vpop.f32.mrf.mxu0
    %v236 = vadd.f32 %v214, %v235
    %237 = vdwg.mxu0
    %238 = vmatpush.msra.mxu0 %v146
    %239 = vmatpush.msra.mxu0 %v144
    %240 = vmatpush.msra.mxu0 %v142
    %241 = vmatpush.msra.mxu0 %v140
    %242 = vmatpush.msra.mxu0 %v138
    %243 = vmatpush.msra.mxu0 %v136
    %244 = vmatpush.msra.mxu0 %v134
    %245 = vmatpush.msra.mxu0 %v132
    %246 = vmatpush.msra.mxu0 %v130
    %247 = vmatpush.msra.mxu0 %v128
    %248 = vmatpush.msra.mxu0 %v126
    %249 = vmatpush.msra.mxu0 %v124
    %250 = vmatpush.msra.mxu0 %v122
    %251 = vmatpush.msra.mxu0 %v120
    %252 = vmatpush.msra.mxu0 %v118
    %253 = vmatpush.msra.mxu0 %v116
    %254 = vmatmul.f32.gmra.mxu0 %v81
    %v255 = vpop.f32.mrf.mxu0
    %v256 = vadd.f32 %v236, %v255
    %257 = vdwg.mxu0
    %258 = vmatpush.msra.mxu0 %v178
    %259 = vmatpush.msra.mxu0 %v176
    %260 = vmatpush.msra.mxu0 %v174
    %261 = vmatpush.msra.mxu0 %v172
    %262 = vmatpush.msra.mxu0 %v170
    %263 = vmatpush.msra.mxu0 %v168
    %264 = vmatpush.msra.mxu0 %v166
    %265 = vmatpush.msra.mxu0 %v164
    %266 = vmatpush.msra.mxu0 %v162
    %267 = vmatpush.msra.mxu0 %v160
    %268 = vmatpush.msra.mxu0 %v158
    %269 = vmatpush.msra.mxu0 %v156
    %270 = vmatpush.msra.mxu0 %v154
    %271 = vmatpush.msra.mxu0 %v152
    %272 = vmatpush.msra.mxu0 %v150
    %273 = vmatpush.msra.mxu0 %v148
    %274 = vmatmul.f32.gmra.mxu0 %v82
    %v275 = vpop.f32.mrf.mxu0
    %v276 = vadd.f32 %v256, %v275
    %277 = vdwg.mxu0
    %278 = vmatpush.msra.mxu0 %v210
    %279 = vmatpush.msra.mxu0 %v208
    %280 = vmatpush.msra.mxu0 %v206
    %281 = vmatpush.msra.mxu0 %v204
    %282 = vmatpush.msra.mxu0 %v202
    %283 = vmatpush.msra.mxu0 %v200
    %284 = vmatpush.msra.mxu0 %v198
    %285 = vmatpush.msra.mxu0 %v196
    %286 = vmatpush.msra.mxu0 %v194
    %287 = vmatpush.msra.mxu0 %v192
    %288 = vmatpush.msra.mxu0 %v190
    %289 = vmatpush.msra.mxu0 %v188
    %290 = vmatpush.msra.mxu0 %v186
    %291 = vmatpush.msra.mxu0 %v184
    %292 = vmatpush.msra.mxu0 %v182
    %293 = vmatpush.msra.mxu0 %v180
    %294 = vmatmul.f32.gmra.mxu0 %v83
    %v295 = vpop.f32.mrf.mxu0
    %v296 = vadd.f32 %v276, %v295
    %297 = vdwg.mxu0
    %298 = vmatpush.msra.mxu0 %v115
    %299 = vmatpush.msra.mxu0 %v113
    %300 = vmatpush.msra.mxu0 %v111
    %301 = vmatpush.msra.mxu0 %v109
    %302 = vmatpush.msra.mxu0 %v107
    %303 = vmatpush.msra.mxu0 %v105
    %304 = vmatpush.msra.mxu0 %v103
    %305 = vmatpush.msra.mxu0 %v101
    %306 = vmatpush.msra.mxu0 %v99
    %307 = vmatpush.msra.mxu0 %v97
    %308 = vmatpush.msra.mxu0 %v95
    %309 = vmatpush.msra.mxu0 %v93
    %310 = vmatpush.msra.mxu0 %v91
    %311 = vmatpush.msra.mxu0 %v89
    %312 = vmatpush.msra.mxu0 %v87
    %313 = vmatpush.msra.mxu0 %v85
    %314 = vmatmul.f32.gmra.mxu0 %v80
    %v315 = vpop.f32.mrf.mxu0
    %v316 = vadd.f32 %v215, %v315
    %317 = vdwg.mxu0
    %318 = vmatpush.msra.mxu0 %v147
    %319 = vmatpush.msra.mxu0 %v145
    %320 = vmatpush.msra.mxu0 %v143
    %321 = vmatpush.msra.mxu0 %v141
    %322 = vmatpush.msra.mxu0 %v139
    %323 = vmatpush.msra.mxu0 %v137
    %324 = vmatpush.msra.mxu0 %v135
    %325 = vmatpush.msra.mxu0 %v133
    %326 = vmatpush.msra.mxu0 %v131
    %327 = vmatpush.msra.mxu0 %v129
    %328 = vmatpush.msra.mxu0 %v127
    %329 = vmatpush.msra.mxu0 %v125
    %330 = vmatpush.msra.mxu0 %v123
    %331 = vmatpush.msra.mxu0 %v121
    %332 = vmatpush.msra.mxu0 %v119
    %333 = vmatpush.msra.mxu0 %v117
    %334 = vmatmul.f32.gmra.mxu0 %v81
    %v335 = vpop.f32.mrf.mxu0
    %v336 = vadd.f32 %v316, %v335
    %337 = vdwg.mxu0
    %338 = vmatpush.msra.mxu0 %v179
    %339 = vmatpush.msra.mxu0 %v177
    %340 = vmatpush.msra.mxu0 %v175
    %341 = vmatpush.msra.mxu0 %v173
    %342 = vmatpush.msra.mxu0 %v171
    %343 = vmatpush.msra.mxu0 %v169
    %344 = vmatpush.msra.mxu0 %v167
    %345 = vmatpush.msra.mxu0 %v165
    %346 = vmatpush.msra.mxu0 %v163
    %347 = vmatpush.msra.mxu0 %v161
    %348 = vmatpush.msra.mxu0 %v159
    %349 = vmatpush.msra.mxu0 %v157
    %350 = vmatpush.msra.mxu0 %v155
    %351 = vmatpush.msra.mxu0 %v153
    %352 = vmatpush.msra.mxu0 %v151
    %353 = vmatpush.msra.mxu0 %v149
    %354 = vmatmul.f32.gmra.mxu0 %v82
    %v355 = vpop.f32.mrf.mxu0
    %v356 = vadd.f32 %v336, %v355
    %357 = vdwg.mxu0
    %358 = vmatpush.msra.mxu0 %v211
    %359 = vmatpush.msra.mxu0 %v209
    %360 = vmatpush.msra.mxu0 %v207
    %361 = vmatpush.msra.mxu0 %v205
    %362 = vmatpush.msra.mxu0 %v203
    %363 = vmatpush.msra.mxu0 %v201
    %364 = vmatpush.msra.mxu0 %v199
    %365 = vmatpush.msra.mxu0 %v197
    %366 = vmatpush.msra.mxu0 %v195
    %367 = vmatpush.msra.mxu0 %v193
    %368 = vmatpush.msra.mxu0 %v191
    %369 = vmatpush.msra.mxu0 %v189
    %370 = vmatpush.msra.mxu0 %v187
    %371 = vmatpush.msra.mxu0 %v185
    %372 = vmatpush.msra.mxu0 %v183
    %373 = vmatpush.msra.mxu0 %v181
    %374 = vmatmul.f32.gmra.mxu0 %v83
    %v375 = vpop.f32.mrf.mxu0
    %v376 = vadd.f32 %v356, %v375
    %377 = vdwg.mxu0
    %v378 = vmul.f32 %v296, 0.5
    %v379 = vmul.f32 %v376, 0.5
    %v380 = vmul.f32 %v296, 0.70710677
    %v381 = vmul.f32 %v376, 0.70710677
    %v382 = vmul.f32 %v380, %v380
    %v383 = vmin.f32 16.0, %v382
    %v384 = vmul.f32 %v383, 2.1237322e-06
    %v385 = vadd.f32 %v384, 0.00028619796
    %v386 = vmul.f32 %v383, %v385
    %v387 = vadd.f32 %v386, 0.0036580483
    %v388 = vmul.f32 %v383, %v387
    %v389 = vadd.f32 %v388, 0.05243302
    %v390 = vmul.f32 %v383, %v389
    %v391 = vadd.f32 %v390, 0.18741608
    %v392 = vmul.f32 %v383, %v391
    %v393 = vadd.f32 %v392, 1.1283791
    %v394 = vmul.f32 %v380, %v393
    %v395 = vmul.f32 %v383, 3.8918573e-05
    %v396 = vadd.f32 %v395, 0.001143296
    %v397 = vmul.f32 %v383, %v396
    %v398 = vadd.f32 %v397, 0.014752088
    %v399 = vmul.f32 %v383, %v398
    %v400 = vadd.f32 %v399, 0.112945676
    %v401 = vmul.f32 %v383, %v400
    %v402 = vadd.f32 %v401, 0.4994258
    %v403 = vmul.f32 %v383, %v402
    %v404 = vadd.f32 %v403, 1.0
    %v405 = vrcp.pop %v404
    %v406 = vmul.f32 %v404, %v405
    %v407 = vsub.f32 1.0, %v406
    %v408 = vmul.f32 %v405, %v407
    %v409 = vadd.f32 %v405, %v408
    %vm410 = vweird.f32 %v404
    %vm411 = vweird.f32 %v405
    %vm412 = vmor %vm410, %vm411
    %v413 = vsel %vm412, %v405, %v409
    %v414 = vand.u32 2147483647, %v404
    %vm415 = vcmp.eq.f32.partialorder %v414, 8.507059e+37
    %v416 = vand.u32 %v404, 2147483648
    %v417 = vor.u32 1.1754944e-38, %v416
    %v418 = vsel %vm415, %v417, %v413
    %v419 = vmul.f32 %v394, %v418
    %v420 = vmin.f32 %v419, 1.0
    %v421 = vmax.f32 %v420, -1.0
    %v422 = vmul.f32 %v381, %v381
    %v423 = vmin.f32 16.0, %v422
    %v424 = vmul.f32 %v423, 2.1237322e-06
    %v425 = vadd.f32 %v424, 0.00028619796
    %v426 = vmul.f32 %v423, %v425
    %v427 = vadd.f32 %v426, 0.0036580483
    %v428 = vmul.f32 %v423, %v427
    %v429 = vadd.f32 %v428, 0.05243302
    %v430 = vmul.f32 %v423, %v429
    %v431 = vadd.f32 %v430, 0.18741608
    %v432 = vmul.f32 %v423, %v431
    %v433 = vadd.f32 %v432, 1.1283791
    %v434 = vmul.f32 %v381, %v433
    %v435 = vmul.f32 %v423, 3.8918573e-05
    %v436 = vadd.f32 %v435, 0.001143296
    %v437 = vmul.f32 %v423, %v436
    %v438 = vadd.f32 %v437, 0.014752088
    %v439 = vmul.f32 %v423, %v438
    %v440 = vadd.f32 %v439, 0.112945676
    %v441 = vmul.f32 %v423, %v440
    %v442 = vadd.f32 %v441, 0.4994258
    %v443 = vmul.f32 %v423, %v442
    %v444 = vadd.f32 %v443, 1.0
    %v445 = vrcp.pop %v444
    %v446 = vmul.f32 %v444, %v445
    %v447 = vsub.f32 1.0, %v446
    %v448 = vmul.f32 %v445, %v447
    %v449 = vadd.f32 %v445, %v448
    %vm450 = vweird.f32 %v444
    %vm451 = vweird.f32 %v445
    %vm452 = vmor %vm450, %vm451
    %v453 = vsel %vm452, %v445, %v449
    %v454 = vand.u32 2147483647, %v444
    %vm455 = vcmp.eq.f32.partialorder %v454, 8.507059e+37
    %v456 = vand.u32 %v444, 2147483648
    %v457 = vor.u32 1.1754944e-38, %v456
    %v458 = vsel %vm455, %v457, %v453
    %v459 = vmul.f32 %v434, %v458
    %v460 = vmin.f32 %v459, 1.0
    %v461 = vmax.f32 %v460, -1.0
    %v462 = vadd.f32 %v421, 1.0
    %v463 = vadd.f32 %v461, 1.0
    %v464 = vmul.f32 %v378, %v462
    %v465 = vmul.f32 %v379, %v463
    %v466 = vld [vmem:[#allocation8] sm:$0xff]
    %v467 = vld [vmem:[#allocation8 + $0x8] sm:$0xff]
    %v468 = vld [vmem:[#allocation8 + $0x10] sm:$0xff]
    %v469 = vld [vmem:[#allocation8 + $0x18] sm:$0xff]
    %v470 = vld [vmem:[#allocation8 + $0x20] sm:$0xff]
    %v471 = vld [vmem:[#allocation8 + $0x28] sm:$0xff]
    %v472 = vld [vmem:[#allocation8 + $0x30] sm:$0xff]
    %v473 = vld [vmem:[#allocation8 + $0x38] sm:$0xff]
    %v474 = vld [vmem:[#allocation8 + $0x40] sm:$0xff]
    %v475 = vld [vmem:[#allocation8 + $0x48] sm:$0xff]
    %v476 = vld [vmem:[#allocation8 + $0x50] sm:$0xff]
    %v477 = vld [vmem:[#allocation8 + $0x58] sm:$0xff]
    %v478 = vld [vmem:[#allocation8 + $0x60] sm:$0xff]
    %v479 = vld [vmem:[#allocation8 + $0x68] sm:$0xff]
    %v480 = vld [vmem:[#allocation8 + $0x70] sm:$0xff]
    %v481 = vld [vmem:[#allocation8 + $0x78] sm:$0xff]
    %v482 = vld [vmem:[#allocation8 + $0x80] sm:$0xff]
    %v483 = vld [vmem:[#allocation8 + $0x88] sm:$0xff]
    %v484 = vld [vmem:[#allocation8 + $0x90] sm:$0xff]
    %v485 = vld [vmem:[#allocation8 + $0x98] sm:$0xff]
    %v486 = vld [vmem:[#allocation8 + $0xa0] sm:$0xff]
    %v487 = vld [vmem:[#allocation8 + $0xa8] sm:$0xff]
    %v488 = vld [vmem:[#allocation8 + $0xb0] sm:$0xff]
    %v489 = vld [vmem:[#allocation8 + $0xb8] sm:$0xff]
    %v490 = vld [vmem:[#allocation8 + $0xc0] sm:$0xff]
    %v491 = vld [vmem:[#allocation8 + $0xc8] sm:$0xff]
    %v492 = vld [vmem:[#allocation8 + $0xd0] sm:$0xff]
    %v493 = vld [vmem:[#allocation8 + $0xd8] sm:$0xff]
    %v494 = vld [vmem:[#allocation8 + $0xe0] sm:$0xff]
    %v495 = vld [vmem:[#allocation8 + $0xe8] sm:$0xff]
    %v496 = vld [vmem:[#allocation8 + $0xf0] sm:$0xff]
    %v497 = vld [vmem:[#allocation8 + $0xf8] sm:$0xff]
    %v498 = vld [vmem:[%s4] sm:$0x1]
    %v500 = vperm.slane %v498, 0
    %502 = vmatpush.msra.mxu0 %v481
    %503 = vmatpush.msra.mxu0 %v480
    %504 = vmatpush.msra.mxu0 %v479
    %505 = vmatpush.msra.mxu0 %v478
    %506 = vmatpush.msra.mxu0 %v477
    %507 = vmatpush.msra.mxu0 %v476
    %508 = vmatpush.msra.mxu0 %v475
    %509 = vmatpush.msra.mxu0 %v474
    %510 = vmatpush.msra.mxu0 %v473
    %511 = vmatpush.msra.mxu0 %v472
    %512 = vmatpush.msra.mxu0 %v471
    %513 = vmatpush.msra.mxu0 %v470
    %514 = vmatpush.msra.mxu0 %v469
    %515 = vmatpush.msra.mxu0 %v468
    %516 = vmatpush.msra.mxu0 %v467
    %517 = vmatpush.msra.mxu0 %v466
    %518 = vmatmul.f32.gmra.mxu0 %v464
    %v519 = vpop.f32.mrf.mxu0
    %v520 = vadd.f32 %v500, %v519
    %521 = vdwg.mxu0
    %522 = vmatpush.msra.mxu0 %v497
    %523 = vmatpush.msra.mxu0 %v496
    %524 = vmatpush.msra.mxu0 %v495
    %525 = vmatpush.msra.mxu0 %v494
    %526 = vmatpush.msra.mxu0 %v493
    %527 = vmatpush.msra.mxu0 %v492
    %528 = vmatpush.msra.mxu0 %v491
    %529 = vmatpush.msra.mxu0 %v490
    %530 = vmatpush.msra.mxu0 %v489
    %531 = vmatpush.msra.mxu0 %v488
    %532 = vmatpush.msra.mxu0 %v487
    %533 = vmatpush.msra.mxu0 %v486
    %534 = vmatpush.msra.mxu0 %v485
    %535 = vmatpush.msra.mxu0 %v484
    %536 = vmatpush.msra.mxu0 %v483
    %537 = vmatpush.msra.mxu0 %v482
    %538 = vmatmul.f32.gmra.mxu0 %v465
    %v539 = vpop.f32.mrf.mxu0
    %v540 = vadd.f32 %v520, %v539
    %541 = vdwg.mxu0
    %542 = vst [vmem:[#allocation10] sm:$0xff] %v540
    // Predicated region
    $region38: #{classification_head.1} parent=1 // pred_check
      _
    $region39: #{classification_head.1} parent=1 // pred_check_branch
      %544 = sbr.rel (0) target = $region41
    $region40: #{classification_head.1} parent=1 // pred_region
      %546 = vsyncadd [#allocation4], 0
      %s548 = sshll.u32 [#allocation10], 4
      %s549 = int_to_ptr.vmem [resolvable:$true] %s548
      %s550 = sshll.u32 %s5, 4
      %s551 = int_to_ptr.hbm [resolvable:$true] %s550
      %553 = dma.vmem_to_hbm [thread:$0]  %s549, 128, %s551, [#allocation4]
    $region41: #{classification_head.1} parent=1 // pred_fallthru
      _
    // Predicated region
    $region42: #{classification_head.1} parent=1 // pred_check
      _
    $region43: #{classification_head.1} parent=1 // pred_check_branch
      %555 = sbr.rel (0) target = $region45
    $region44: #{classification_head.1} parent=1 // pred_region
      %557 = dma.done [#allocation4], 128
    $region45: #{classification_head.1} parent=1 // pred_fallthru
      _
    %558 = vsyncpa [#allocation3], 1
    %559 = vsyncpa [#allocation6], 1
    %560 = vsyncpa [#allocation9], 1
    %561 = vsyncpa [#allocation4], 1

</llo_original>
